<compile_context>
chip_gen: v5e
topology: v5e:2x2
jax: 0.10.0
libtpu: 0.0.40
codegen_flags: <defaults>
</compile_context>

<pallas_src>
import functools

import jax
import jax.numpy as jnp
from jax import lax
from jax.experimental import pallas as pl
from jax.experimental.pallas import tpu as pltpu


def _bilstm_kernel(x_ref, lens_ref, ml_ref,
                   wih_ref, b_ref, whh_f_ref, whh_b_ref,
                   out_ref, xpf_ref, xpb_ref):
    """One bidirectional LSTM layer over the whole (small) sequence in VMEM.

    x_ref     : (T, B, D)   time-major input
    lens_ref  : (B, 1)      int32 sequence lengths (VMEM, for vector masking)
    ml_ref    : (1,)        int32 max(lengths) (SMEM, loop trip-count bound)
    wih_ref   : (D, 8H)     [W_ih_f^T | W_ih_b^T]
    b_ref     : (1, 8H)     [b_f | b_b]  (each = b_ih + b_hh)
    whh_*_ref : (H, 4H)     recurrent weights per direction
    out_ref   : (T, B, 2H)  fwd half in [:, :, :H], bwd half in [:, :, H:]
    xp*_ref   : (T, B, 4H)  VMEM scratch holding the hoisted input projection
    """
    T, B, _ = x_ref.shape
    H = whh_f_ref.shape[0]
    G = 4 * H

    # ---- one-time preamble (no serial dependence; off the critical path) ----
    wih = wih_ref[...]                  # (D, 2G)
    bias = b_ref[...]                   # (1, 2G)

    def proj_body(t, carry):
        p = jnp.dot(x_ref[t], wih, preferred_element_type=jnp.float32) + bias  # (B, 2G)
        xpf_ref[t] = p[:, :G]
        xpb_ref[t] = p[:, G:]
        return carry

    # Static trip count + unroll: the T independent projections pipeline through
    # the MXU instead of sitting on the recurrence chain.
    lax.fori_loop(0, T, proj_body, jnp.int32(0), unroll=True)

    # Zero the padded tail once; the recurrence only visits t < max_len.
    out_ref[...] = jnp.zeros_like(out_ref)

    # Hoisted loads: W_hh (H x 4H) stays resident across the whole loop.
    whh_f = whh_f_ref[...]
    whh_b = whh_b_ref[...]
    lens = lens_ref[...]                # (B, 1) int32
    max_len = ml_ref[0]                 # scalar int32 from SMEM

    def cell(pre, h, c, whh):
        # pre = x_t @ W_ih^T + b  (precomputed); only the recurrent matmul here.
        g = pre + jnp.dot(h, whh, preferred_element_type=jnp.float32)   # (B, 4H)
        s = jax.nn.sigmoid(g)           # full-width EUP op
        th = jnp.tanh(g)                # full-width EUP op
        i = s[:, 0 * H:1 * H]
        f = s[:, 1 * H:2 * H]
        o = s[:, 3 * H:4 * H]
        gg = th[:, 2 * H:3 * H]
        c_new = f * c + i * gg
        h_new = o * jnp.tanh(c_new)
        return h_new, c_new

    zeros = jnp.zeros((B, H), jnp.float32)

    def body(k, carry):
        hf, cf, hb, cb = carry
        t_f = k
        t_b = max_len - 1 - k

        # forward direction at t_f
        hf_n, cf_n = cell(xpf_ref[t_f], hf, cf, whh_f)
        vf = t_f < lens                                  # (B, 1) bool
        hf = jnp.where(vf, hf_n, hf)
        cf = jnp.where(vf, cf_n, cf)
        out_ref[t_f, :, 0:H] = jnp.where(vf, hf, 0.0)

        # backward direction at t_b (independent chain -> interleaves with fwd)
        hb_n, cb_n = cell(xpb_ref[t_b], hb, cb, whh_b)
        vb = t_b < lens
        hb = jnp.where(vb, hb_n, hb)
        cb = jnp.where(vb, cb_n, cb)
        out_ref[t_b, :, H:2 * H] = jnp.where(vb, hb, 0.0)

        return (hf, cf, hb, cb)

    # Dynamic trip count: skip fully-padded timesteps entirely.
    lax.fori_loop(0, max_len, body, (zeros, zeros, zeros, zeros))


def _bilstm_layer_tm(x_tbd, lens2, max_len, params):
    """One bidirectional LSTM layer, time-major in/out: (T,B,D) -> (T,B,2H)."""
    T, B, D = x_tbd.shape
    H = params["whh_f"].shape[0]
    G = 4 * H

    wih_cat = jnp.concatenate([params["wih_f"], params["wih_b"]], axis=1)   # (D, 2G)
    b_cat = jnp.concatenate([params["b_f"], params["b_b"]], axis=1)         # (1, 2G)

    flops = 2 * T * B * D * 2 * G + 2 * 2 * T * B * H * G + 10 * T * B * 2 * H
    transcendentals = 2 * T * B * (2 * G + H)
    bytes_accessed = 4 * (T * B * D + D * 2 * G + 2 * H * G + 2 * G
                          + T * B * 2 * H + B) + 4

    return pl.pallas_call(
        _bilstm_kernel,
        out_shape=jax.ShapeDtypeStruct((T, B, 2 * H), jnp.float32),
        in_specs=[
            pl.BlockSpec(memory_space=pltpu.MemorySpace.VMEM),   # x (T,B,D)
            pl.BlockSpec(memory_space=pltpu.MemorySpace.VMEM),   # lengths (B,1)
            pl.BlockSpec(memory_space=pltpu.MemorySpace.SMEM),   # max_len (1,)
            pl.BlockSpec(memory_space=pltpu.MemorySpace.VMEM),   # W_ih cat (D,8H)
            pl.BlockSpec(memory_space=pltpu.MemorySpace.VMEM),   # bias cat (1,8H)
            pl.BlockSpec(memory_space=pltpu.MemorySpace.VMEM),   # W_hh fwd (H,4H)
            pl.BlockSpec(memory_space=pltpu.MemorySpace.VMEM),   # W_hh bwd (H,4H)
        ],
        out_specs=pl.BlockSpec(memory_space=pltpu.MemorySpace.VMEM),
        scratch_shapes=[
            pltpu.VMEM((T, B, G), jnp.float32),   # hoisted fwd input projection
            pltpu.VMEM((T, B, G), jnp.float32),   # hoisted bwd input projection
        ],
        cost_estimate=pl.CostEstimate(flops=flops,
                                      transcendentals=transcendentals,
                                      bytes_accessed=bytes_accessed),
    )(x_tbd.astype(jnp.float32), lens2, max_len, wih_cat, b_cat,
      params["whh_f"], params["whh_b"])


def lstm_wrapper_forward(x, lengths, layer_params, concat=False):
    """Equivalent of LSTMWrapper.forward (eval mode). x: (B, T, D) batch_first."""
    B = x.shape[0]
    lens2 = lengths.astype(jnp.int32).reshape(B, 1)
    max_len = jnp.max(lengths).astype(jnp.int32).reshape(1)

    # batch_first -> time-major exactly once; stay time-major between layers.
    out = jnp.transpose(x, (1, 0, 2)).astype(jnp.float32)    # (T, B, D)
    outputs = []
    for p in layer_params:
        # F.dropout(p=dropout, training=False) == identity (inference).
        out = _bilstm_layer_tm(out, lens2, max_len, p)        # (T, B, 2H)
        outputs.append(out)

    res = jnp.concatenate(outputs, axis=-1) if concat else outputs[-1]
    return jnp.transpose(res, (1, 0, 2))                      # back to (B, T, *)


def init_bilstm_params(key, input_dim, hidden_dim):
    """Deterministic PyTorch-style init: U(-1/sqrt(H), 1/sqrt(H))."""
    k = 1.0 / jnp.sqrt(jnp.float32(hidden_dim))
    keys = jax.random.split(key, 8)

    def u(kk, shape):
        return jax.random.uniform(kk, shape, jnp.float32, -k, k)

    H4 = 4 * hidden_dim
    return {
        # forward direction (weights pre-transposed: W^T)
        "wih_f": u(keys[0], (input_dim, H4)),
        "whh_f": u(keys[1], (hidden_dim, H4)),
        "b_f": (u(keys[2], (1, H4)) + u(keys[3], (1, H4))),
        # reverse direction
        "wih_b": u(keys[4], (input_dim, H4)),
        "whh_b": u(keys[5], (hidden_dim, H4)),
        "b_b": (u(keys[6], (1, H4)) + u(keys[7], (1, H4))),
    }


# ----------------------- pure-JAX reference (for sanity) ---------------------
def _ref_bilstm_layer(x, lengths, p):
    B, T, _ = x.shape
    H = p["whh_f"].shape[0]
    lens = lengths.astype(jnp.int32).reshape(B, 1)

    def cell(x_t, h, c, wih, whh, b):
        g = x_t @ wih + h @ whh + b
        i = jax.nn.sigmoid(g[:, 0 * H:1 * H])
        f = jax.nn.sigmoid(g[:, 1 * H:2 * H])
        gg = jnp.tanh(g[:, 2 * H:3 * H])
        o = jax.nn.sigmoid(g[:, 3 * H:4 * H])
        c_new = f * c + i * gg
        return o * jnp.tanh(c_new), c_new

    def direction(wih, whh, b, reverse):
        def step(carry, t):
            h, c = carry
            hn, cn = cell(x[:, t, :], h, c, wih, whh, b)
            valid = t < lens
            h = jnp.where(valid, hn, h)
            c = jnp.where(valid, cn, c)
            return (h, c), jnp.where(valid, h, 0.0)

        ts = jnp.arange(T)[::-1] if reverse else jnp.arange(T)
        z = jnp.zeros((B, H), jnp.float32)
        _, ys = lax.scan(step, (z, z), ts)          # (T, B, H) in visit order
        ys = ys[::-1] if reverse else ys
        return jnp.transpose(ys, (1, 0, 2))

    of = direction(p["wih_f"], p["whh_f"], p["b_f"], reverse=False)
    ob = direction(p["wih_b"], p["whh_b"], p["b_b"], reverse=True)
    return jnp.concatenate([of, ob], axis=-1)


if __name__ == "__main__":
    # Small shapes consistent with the module: input_dim=4, hidden_dim=32,
    # bidir=True, batch=3, padded seq=8, max(length)=7 < T (exercises the
    # zero-padded tail / clipped trip count path).
    B, T, D, H = 3, 8, 4, 32

    key = jax.random.PRNGKey(0)
    kx, kp1, kp2 = jax.random.split(key, 3)
    x = jax.random.normal(kx, (B, T, D), jnp.float32)
    lengths = jnp.array([6, 3, 7], dtype=jnp.int32)

    # ---- single layer (n_layer=1, concat=False — module defaults) ----
    p1 = init_bilstm_params(kp1, D, H)
    run1 = jax.jit(functools.partial(lstm_wrapper_forward, concat=False))
    out1 = jax.block_until_ready(run1(x, lengths, [p1]))
    assert out1.shape == (B, T, 2 * H), out1.shape

    ref1 = _ref_bilstm_layer(x, lengths, p1)
    assert jnp.allclose(out1, ref1, atol=1e-5, rtol=1e-5), "layer-1 mismatch"

    # ---- two layers + concat path ----
    p2 = init_bilstm_params(kp2, 2 * H, H)
    run2 = jax.jit(functools.partial(lstm_wrapper_forward, concat=True))
    out2 = jax.block_until_ready(run2(x, lengths, [p1, p2]))
    assert out2.shape == (B, T, 4 * H), out2.shape

    ref2 = jnp.concatenate([ref1, _ref_bilstm_layer(ref1, lengths, p2)], axis=-1)
    assert jnp.allclose(out2, ref2, atol=1e-5, rtol=1e-5), "layer-2 mismatch"

    print("KERNEL_OK")
</pallas_src>

<mosaic_0001>
module attributes {stable_mosaic.version = 11 : i64} {
  func.func @_bilstm_kernel(%arg0: memref<8x3x4xf32, #tpu.memory_space<vmem>>, %arg1: memref<3x1xi32, #tpu.memory_space<vmem>>, %arg2: memref<1xi32, #tpu.memory_space<smem>>, %arg3: memref<4x256xf32, #tpu.memory_space<vmem>>, %arg4: memref<1x256xf32, #tpu.memory_space<vmem>>, %arg5: memref<32x128xf32, #tpu.memory_space<vmem>>, %arg6: memref<32x128xf32, #tpu.memory_space<vmem>>, %arg7: memref<8x3x64xf32, #tpu.memory_space<vmem>>, %arg8: memref<8x3x128xf32, #tpu.memory_space<vmem>>, %arg9: memref<8x3x128xf32, #tpu.memory_space<vmem>>) attributes {dimension_semantics = [], scalar_prefetch = 0 : i64, scratch_operands = 2 : i64, tpu.core_type = #tpu.core_type<tc>} {
    %c0 = arith.constant 0 : index
    %c0_0 = arith.constant 0 : index
    %0 = vector.load %arg3[%c0, %c0_0] : memref<4x256xf32, #tpu.memory_space<vmem>>, vector<4x256xf32>
    %c0_1 = arith.constant 0 : index
    %c0_2 = arith.constant 0 : index
    %1 = vector.load %arg4[%c0_1, %c0_2] : memref<1x256xf32, #tpu.memory_space<vmem>>, vector<1x256xf32>
    %c0_i32 = arith.constant 0 : i32
    %2 = arith.index_cast %c0_i32 : i32 to index
    %c0_3 = arith.constant 0 : index
    %c0_4 = arith.constant 0 : index
    %3 = vector.load %arg0[%2, %c0_3, %c0_4] : memref<8x3x4xf32, #tpu.memory_space<vmem>>, vector<1x3x4xf32>
    %4 = vector.shape_cast %3 : vector<1x3x4xf32> to vector<3x4xf32>
    %cst = arith.constant dense<0.000000e+00> : vector<3x256xf32>
    %5 = tpu.matmul %4, %0, %cst {dimension_numbers = #tpu.dot_dimension_numbers<[1], [0], [0], [1], [0, 0, 1, 1], [], []>} : vector<3x4xf32>, vector<4x256xf32>, vector<3x256xf32> -> vector<3x256xf32>
    %6 = vector.broadcast %1 : vector<1x256xf32> to vector<3x256xf32>
    %7 = arith.addf %5, %6 : vector<3x256xf32>
    %8 = vector.extract_strided_slice %7 {offsets = [0, 0], sizes = [3, 128], strides = [1, 1]} : vector<3x256xf32> to vector<3x128xf32>
    %9 = arith.index_cast %c0_i32 : i32 to index
    %c0_5 = arith.constant 0 : index
    %c0_6 = arith.constant 0 : index
    %10 = vector.load %arg8[%9, %c0_5, %c0_6] : memref<8x3x128xf32, #tpu.memory_space<vmem>>, vector<1x3x128xf32>
    %11 = vector.shape_cast %10 : vector<1x3x128xf32> to vector<3x128xf32>
    %12 = vector.shape_cast %8 : vector<3x128xf32> to vector<1x3x128xf32>
    tpu.vector_store %arg8[%9, %c0_5, %c0_6], %12 {strides = array<i32>} : memref<8x3x128xf32, #tpu.memory_space<vmem>>, vector<1x3x128xf32>,
    %13 = vector.extract_strided_slice %7 {offsets = [0, 128], sizes = [3, 128], strides = [1, 1]} : vector<3x256xf32> to vector<3x128xf32>
    %14 = arith.index_cast %c0_i32 : i32 to index
    %c0_7 = arith.constant 0 : index
    %c0_8 = arith.constant 0 : index
    %15 = vector.load %arg9[%14, %c0_7, %c0_8] : memref<8x3x128xf32, #tpu.memory_space<vmem>>, vector<1x3x128xf32>
    %16 = vector.shape_cast %15 : vector<1x3x128xf32> to vector<3x128xf32>
    %17 = vector.shape_cast %13 : vector<3x128xf32> to vector<1x3x128xf32>
    tpu.vector_store %arg9[%14, %c0_7, %c0_8], %17 {strides = array<i32>} : memref<8x3x128xf32, #tpu.memory_space<vmem>>, vector<1x3x128xf32>,
    %c1_i32 = arith.constant 1 : i32
    %18 = arith.index_cast %c1_i32 : i32 to index
    %c0_9 = arith.constant 0 : index
    %c0_10 = arith.constant 0 : index
    %19 = vector.load %arg0[%18, %c0_9, %c0_10] : memref<8x3x4xf32, #tpu.memory_space<vmem>>, vector<1x3x4xf32>
    %20 = vector.shape_cast %19 : vector<1x3x4xf32> to vector<3x4xf32>
    %cst_11 = arith.constant dense<0.000000e+00> : vector<3x256xf32>
    %21 = tpu.matmul %20, %0, %cst_11 {dimension_numbers = #tpu.dot_dimension_numbers<[1], [0], [0], [1], [0, 0, 1, 1], [], []>} : vector<3x4xf32>, vector<4x256xf32>, vector<3x256xf32> -> vector<3x256xf32>
    %22 = vector.broadcast %1 : vector<1x256xf32> to vector<3x256xf32>
    %23 = arith.addf %21, %22 : vector<3x256xf32>
    %24 = vector.extract_strided_slice %23 {offsets = [0, 0], sizes = [3, 128], strides = [1, 1]} : vector<3x256xf32> to vector<3x128xf32>
    %25 = arith.index_cast %c1_i32 : i32 to index
    %c0_12 = arith.constant 0 : index
    %c0_13 = arith.constant 0 : index
    %26 = vector.load %arg8[%25, %c0_12, %c0_13] : memref<8x3x128xf32, #tpu.memory_space<vmem>>, vector<1x3x128xf32>
    %27 = vector.shape_cast %26 : vector<1x3x128xf32> to vector<3x128xf32>
    %28 = vector.shape_cast %24 : vector<3x128xf32> to vector<1x3x128xf32>
    tpu.vector_store %arg8[%25, %c0_12, %c0_13], %28 {strides = array<i32>} : memref<8x3x128xf32, #tpu.memory_space<vmem>>, vector<1x3x128xf32>,
    %29 = vector.extract_strided_slice %23 {offsets = [0, 128], sizes = [3, 128], strides = [1, 1]} : vector<3x256xf32> to vector<3x128xf32>
    %30 = arith.index_cast %c1_i32 : i32 to index
    %c0_14 = arith.constant 0 : index
    %c0_15 = arith.constant 0 : index
    %31 = vector.load %arg9[%30, %c0_14, %c0_15] : memref<8x3x128xf32, #tpu.memory_space<vmem>>, vector<1x3x128xf32>
    %32 = vector.shape_cast %31 : vector<1x3x128xf32> to vector<3x128xf32>
    %33 = vector.shape_cast %29 : vector<3x128xf32> to vector<1x3x128xf32>
    tpu.vector_store %arg9[%30, %c0_14, %c0_15], %33 {strides = array<i32>} : memref<8x3x128xf32, #tpu.memory_space<vmem>>, vector<1x3x128xf32>,
    %c2_i32 = arith.constant 2 : i32
    %34 = arith.index_cast %c2_i32 : i32 to index
    %c0_16 = arith.constant 0 : index
    %c0_17 = arith.constant 0 : index
    %35 = vector.load %arg0[%34, %c0_16, %c0_17] : memref<8x3x4xf32, #tpu.memory_space<vmem>>, vector<1x3x4xf32>
    %36 = vector.shape_cast %35 : vector<1x3x4xf32> to vector<3x4xf32>
    %cst_18 = arith.constant dense<0.000000e+00> : vector<3x256xf32>
    %37 = tpu.matmul %36, %0, %cst_18 {dimension_numbers = #tpu.dot_dimension_numbers<[1], [0], [0], [1], [0, 0, 1, 1], [], []>} : vector<3x4xf32>, vector<4x256xf32>, vector<3x256xf32> -> vector<3x256xf32>
    %38 = vector.broadcast %1 : vector<1x256xf32> to vector<3x256xf32>
    %39 = arith.addf %37, %38 : vector<3x256xf32>
    %40 = vector.extract_strided_slice %39 {offsets = [0, 0], sizes = [3, 128], strides = [1, 1]} : vector<3x256xf32> to vector<3x128xf32>
    %41 = arith.index_cast %c2_i32 : i32 to index
    %c0_19 = arith.constant 0 : index
    %c0_20 = arith.constant 0 : index
    %42 = vector.load %arg8[%41, %c0_19, %c0_20] : memref<8x3x128xf32, #tpu.memory_space<vmem>>, vector<1x3x128xf32>
    %43 = vector.shape_cast %42 : vector<1x3x128xf32> to vector<3x128xf32>
    %44 = vector.shape_cast %40 : vector<3x128xf32> to vector<1x3x128xf32>
    tpu.vector_store %arg8[%41, %c0_19, %c0_20], %44 {strides = array<i32>} : memref<8x3x128xf32, #tpu.memory_space<vmem>>, vector<1x3x128xf32>,
    %45 = vector.extract_strided_slice %39 {offsets = [0, 128], sizes = [3, 128], strides = [1, 1]} : vector<3x256xf32> to vector<3x128xf32>
    %46 = arith.index_cast %c2_i32 : i32 to index
    %c0_21 = arith.constant 0 : index
    %c0_22 = arith.constant 0 : index
    %47 = vector.load %arg9[%46, %c0_21, %c0_22] : memref<8x3x128xf32, #tpu.memory_space<vmem>>, vector<1x3x128xf32>
    %48 = vector.shape_cast %47 : vector<1x3x128xf32> to vector<3x128xf32>
    %49 = vector.shape_cast %45 : vector<3x128xf32> to vector<1x3x128xf32>
    tpu.vector_store %arg9[%46, %c0_21, %c0_22], %49 {strides = array<i32>} : memref<8x3x128xf32, #tpu.memory_space<vmem>>, vector<1x3x128xf32>,
    %c3_i32 = arith.constant 3 : i32
    %50 = arith.index_cast %c3_i32 : i32 to index
    %c0_23 = arith.constant 0 : index
    %c0_24 = arith.constant 0 : index
    %51 = vector.load %arg0[%50, %c0_23, %c0_24] : memref<8x3x4xf32, #tpu.memory_space<vmem>>, vector<1x3x4xf32>
    %52 = vector.shape_cast %51 : vector<1x3x4xf32> to vector<3x4xf32>
    %cst_25 = arith.constant dense<0.000000e+00> : vector<3x256xf32>
    %53 = tpu.matmul %52, %0, %cst_25 {dimension_numbers = #tpu.dot_dimension_numbers<[1], [0], [0], [1], [0, 0, 1, 1], [], []>} : vector<3x4xf32>, vector<4x256xf32>, vector<3x256xf32> -> vector<3x256xf32>
    %54 = vector.broadcast %1 : vector<1x256xf32> to vector<3x256xf32>
    %55 = arith.addf %53, %54 : vector<3x256xf32>
    %56 = vector.extract_strided_slice %55 {offsets = [0, 0], sizes = [3, 128], strides = [1, 1]} : vector<3x256xf32> to vector<3x128xf32>
    %57 = arith.index_cast %c3_i32 : i32 to index
    %c0_26 = arith.constant 0 : index
    %c0_27 = arith.constant 0 : index
    %58 = vector.load %arg8[%57, %c0_26, %c0_27] : memref<8x3x128xf32, #tpu.memory_space<vmem>>, vector<1x3x128xf32>
    %59 = vector.shape_cast %58 : vector<1x3x128xf32> to vector<3x128xf32>
    %60 = vector.shape_cast %56 : vector<3x128xf32> to vector<1x3x128xf32>
    tpu.vector_store %arg8[%57, %c0_26, %c0_27], %60 {strides = array<i32>} : memref<8x3x128xf32, #tpu.memory_space<vmem>>, vector<1x3x128xf32>,
    %61 = vector.extract_strided_slice %55 {offsets = [0, 128], sizes = [3, 128], strides = [1, 1]} : vector<3x256xf32> to vector<3x128xf32>
    %62 = arith.index_cast %c3_i32 : i32 to index
    %c0_28 = arith.constant 0 : index
    %c0_29 = arith.constant 0 : index
    %63 = vector.load %arg9[%62, %c0_28, %c0_29] : memref<8x3x128xf32, #tpu.memory_space<vmem>>, vector<1x3x128xf32>
    %64 = vector.shape_cast %63 : vector<1x3x128xf32> to vector<3x128xf32>
    %65 = vector.shape_cast %61 : vector<3x128xf32> to vector<1x3x128xf32>
    tpu.vector_store %arg9[%62, %c0_28, %c0_29], %65 {strides = array<i32>} : memref<8x3x128xf32, #tpu.memory_space<vmem>>, vector<1x3x128xf32>,
    %c4_i32 = arith.constant 4 : i32
    %66 = arith.index_cast %c4_i32 : i32 to index
    %c0_30 = arith.constant 0 : index
    %c0_31 = arith.constant 0 : index
    %67 = vector.load %arg0[%66, %c0_30, %c0_31] : memref<8x3x4xf32, #tpu.memory_space<vmem>>, vector<1x3x4xf32>
    %68 = vector.shape_cast %67 : vector<1x3x4xf32> to vector<3x4xf32>
    %cst_32 = arith.constant dense<0.000000e+00> : vector<3x256xf32>
    %69 = tpu.matmul %68, %0, %cst_32 {dimension_numbers = #tpu.dot_dimension_numbers<[1], [0], [0], [1], [0, 0, 1, 1], [], []>} : vector<3x4xf32>, vector<4x256xf32>, vector<3x256xf32> -> vector<3x256xf32>
    %70 = vector.broadcast %1 : vector<1x256xf32> to vector<3x256xf32>
    %71 = arith.addf %69, %70 : vector<3x256xf32>
    %72 = vector.extract_strided_slice %71 {offsets = [0, 0], sizes = [3, 128], strides = [1, 1]} : vector<3x256xf32> to vector<3x128xf32>
    %73 = arith.index_cast %c4_i32 : i32 to index
    %c0_33 = arith.constant 0 : index
    %c0_34 = arith.constant 0 : index
    %74 = vector.load %arg8[%73, %c0_33, %c0_34] : memref<8x3x128xf32, #tpu.memory_space<vmem>>, vector<1x3x128xf32>
    %75 = vector.shape_cast %74 : vector<1x3x128xf32> to vector<3x128xf32>
    %76 = vector.shape_cast %72 : vector<3x128xf32> to vector<1x3x128xf32>
    tpu.vector_store %arg8[%73, %c0_33, %c0_34], %76 {strides = array<i32>} : memref<8x3x128xf32, #tpu.memory_space<vmem>>, vector<1x3x128xf32>,
    %77 = vector.extract_strided_slice %71 {offsets = [0, 128], sizes = [3, 128], strides = [1, 1]} : vector<3x256xf32> to vector<3x128xf32>
    %78 = arith.index_cast %c4_i32 : i32 to index
    %c0_35 = arith.constant 0 : index
    %c0_36 = arith.constant 0 : index
    %79 = vector.load %arg9[%78, %c0_35, %c0_36] : memref<8x3x128xf32, #tpu.memory_space<vmem>>, vector<1x3x128xf32>
    %80 = vector.shape_cast %79 : vector<1x3x128xf32> to vector<3x128xf32>
    %81 = vector.shape_cast %77 : vector<3x128xf32> to vector<1x3x128xf32>
    tpu.vector_store %arg9[%78, %c0_35, %c0_36], %81 {strides = array<i32>} : memref<8x3x128xf32, #tpu.memory_space<vmem>>, vector<1x3x128xf32>,
    %c5_i32 = arith.constant 5 : i32
    %82 = arith.index_cast %c5_i32 : i32 to index
    %c0_37 = arith.constant 0 : index
    %c0_38 = arith.constant 0 : index
    %83 = vector.load %arg0[%82, %c0_37, %c0_38] : memref<8x3x4xf32, #tpu.memory_space<vmem>>, vector<1x3x4xf32>
    %84 = vector.shape_cast %83 : vector<1x3x4xf32> to vector<3x4xf32>
    %cst_39 = arith.constant dense<0.000000e+00> : vector<3x256xf32>
    %85 = tpu.matmul %84, %0, %cst_39 {dimension_numbers = #tpu.dot_dimension_numbers<[1], [0], [0], [1], [0, 0, 1, 1], [], []>} : vector<3x4xf32>, vector<4x256xf32>, vector<3x256xf32> -> vector<3x256xf32>
    %86 = vector.broadcast %1 : vector<1x256xf32> to vector<3x256xf32>
    %87 = arith.addf %85, %86 : vector<3x256xf32>
    %88 = vector.extract_strided_slice %87 {offsets = [0, 0], sizes = [3, 128], strides = [1, 1]} : vector<3x256xf32> to vector<3x128xf32>
    %89 = arith.index_cast %c5_i32 : i32 to index
    %c0_40 = arith.constant 0 : index
    %c0_41 = arith.constant 0 : index
    %90 = vector.load %arg8[%89, %c0_40, %c0_41] : memref<8x3x128xf32, #tpu.memory_space<vmem>>, vector<1x3x128xf32>
    %91 = vector.shape_cast %90 : vector<1x3x128xf32> to vector<3x128xf32>
    %92 = vector.shape_cast %88 : vector<3x128xf32> to vector<1x3x128xf32>
    tpu.vector_store %arg8[%89, %c0_40, %c0_41], %92 {strides = array<i32>} : memref<8x3x128xf32, #tpu.memory_space<vmem>>, vector<1x3x128xf32>,
    %93 = vector.extract_strided_slice %87 {offsets = [0, 128], sizes = [3, 128], strides = [1, 1]} : vector<3x256xf32> to vector<3x128xf32>
    %94 = arith.index_cast %c5_i32 : i32 to index
    %c0_42 = arith.constant 0 : index
    %c0_43 = arith.constant 0 : index
    %95 = vector.load %arg9[%94, %c0_42, %c0_43] : memref<8x3x128xf32, #tpu.memory_space<vmem>>, vector<1x3x128xf32>
    %96 = vector.shape_cast %95 : vector<1x3x128xf32> to vector<3x128xf32>
    %97 = vector.shape_cast %93 : vector<3x128xf32> to vector<1x3x128xf32>
    tpu.vector_store %arg9[%94, %c0_42, %c0_43], %97 {strides = array<i32>} : memref<8x3x128xf32, #tpu.memory_space<vmem>>, vector<1x3x128xf32>,
    %c6_i32 = arith.constant 6 : i32
    %98 = arith.index_cast %c6_i32 : i32 to index
    %c0_44 = arith.constant 0 : index
    %c0_45 = arith.constant 0 : index
    %99 = vector.load %arg0[%98, %c0_44, %c0_45] : memref<8x3x4xf32, #tpu.memory_space<vmem>>, vector<1x3x4xf32>
    %100 = vector.shape_cast %99 : vector<1x3x4xf32> to vector<3x4xf32>
    %cst_46 = arith.constant dense<0.000000e+00> : vector<3x256xf32>
    %101 = tpu.matmul %100, %0, %cst_46 {dimension_numbers = #tpu.dot_dimension_numbers<[1], [0], [0], [1], [0, 0, 1, 1], [], []>} : vector<3x4xf32>, vector<4x256xf32>, vector<3x256xf32> -> vector<3x256xf32>
    %102 = vector.broadcast %1 : vector<1x256xf32> to vector<3x256xf32>
    %103 = arith.addf %101, %102 : vector<3x256xf32>
    %104 = vector.extract_strided_slice %103 {offsets = [0, 0], sizes = [3, 128], strides = [1, 1]} : vector<3x256xf32> to vector<3x128xf32>
    %105 = arith.index_cast %c6_i32 : i32 to index
    %c0_47 = arith.constant 0 : index
    %c0_48 = arith.constant 0 : index
    %106 = vector.load %arg8[%105, %c0_47, %c0_48] : memref<8x3x128xf32, #tpu.memory_space<vmem>>, vector<1x3x128xf32>
    %107 = vector.shape_cast %106 : vector<1x3x128xf32> to vector<3x128xf32>
    %108 = vector.shape_cast %104 : vector<3x128xf32> to vector<1x3x128xf32>
    tpu.vector_store %arg8[%105, %c0_47, %c0_48], %108 {strides = array<i32>} : memref<8x3x128xf32, #tpu.memory_space<vmem>>, vector<1x3x128xf32>,
    %109 = vector.extract_strided_slice %103 {offsets = [0, 128], sizes = [3, 128], strides = [1, 1]} : vector<3x256xf32> to vector<3x128xf32>
    %110 = arith.index_cast %c6_i32 : i32 to index
    %c0_49 = arith.constant 0 : index
    %c0_50 = arith.constant 0 : index
    %111 = vector.load %arg9[%110, %c0_49, %c0_50] : memref<8x3x128xf32, #tpu.memory_space<vmem>>, vector<1x3x128xf32>
    %112 = vector.shape_cast %111 : vector<1x3x128xf32> to vector<3x128xf32>
    %113 = vector.shape_cast %109 : vector<3x128xf32> to vector<1x3x128xf32>
    tpu.vector_store %arg9[%110, %c0_49, %c0_50], %113 {strides = array<i32>} : memref<8x3x128xf32, #tpu.memory_space<vmem>>, vector<1x3x128xf32>,
    %c7_i32 = arith.constant 7 : i32
    %114 = arith.index_cast %c7_i32 : i32 to index
    %c0_51 = arith.constant 0 : index
    %c0_52 = arith.constant 0 : index
    %115 = vector.load %arg0[%114, %c0_51, %c0_52] : memref<8x3x4xf32, #tpu.memory_space<vmem>>, vector<1x3x4xf32>
    %116 = vector.shape_cast %115 : vector<1x3x4xf32> to vector<3x4xf32>
    %cst_53 = arith.constant dense<0.000000e+00> : vector<3x256xf32>
    %117 = tpu.matmul %116, %0, %cst_53 {dimension_numbers = #tpu.dot_dimension_numbers<[1], [0], [0], [1], [0, 0, 1, 1], [], []>} : vector<3x4xf32>, vector<4x256xf32>, vector<3x256xf32> -> vector<3x256xf32>
    %118 = vector.broadcast %1 : vector<1x256xf32> to vector<3x256xf32>
    %119 = arith.addf %117, %118 : vector<3x256xf32>
    %120 = vector.extract_strided_slice %119 {offsets = [0, 0], sizes = [3, 128], strides = [1, 1]} : vector<3x256xf32> to vector<3x128xf32>
    %121 = arith.index_cast %c7_i32 : i32 to index
    %c0_54 = arith.constant 0 : index
    %c0_55 = arith.constant 0 : index
    %122 = vector.load %arg8[%121, %c0_54, %c0_55] : memref<8x3x128xf32, #tpu.memory_space<vmem>>, vector<1x3x128xf32>
    %123 = vector.shape_cast %122 : vector<1x3x128xf32> to vector<3x128xf32>
    %124 = vector.shape_cast %120 : vector<3x128xf32> to vector<1x3x128xf32>
    tpu.vector_store %arg8[%121, %c0_54, %c0_55], %124 {strides = array<i32>} : memref<8x3x128xf32, #tpu.memory_space<vmem>>, vector<1x3x128xf32>,
    %125 = vector.extract_strided_slice %119 {offsets = [0, 128], sizes = [3, 128], strides = [1, 1]} : vector<3x256xf32> to vector<3x128xf32>
    %126 = arith.index_cast %c7_i32 : i32 to index
    %c0_56 = arith.constant 0 : index
    %c0_57 = arith.constant 0 : index
    %127 = vector.load %arg9[%126, %c0_56, %c0_57] : memref<8x3x128xf32, #tpu.memory_space<vmem>>, vector<1x3x128xf32>
    %128 = vector.shape_cast %127 : vector<1x3x128xf32> to vector<3x128xf32>
    %129 = vector.shape_cast %125 : vector<3x128xf32> to vector<1x3x128xf32>
    tpu.vector_store %arg9[%126, %c0_56, %c0_57], %129 {strides = array<i32>} : memref<8x3x128xf32, #tpu.memory_space<vmem>>, vector<1x3x128xf32>,
    %c8_i32 = arith.constant 8 : i32
    %cst_58 = arith.constant 0.000000e+00 : f32
    %130 = vector.broadcast %cst_58 : f32 to vector<8x3x64xf32>
    %c0_59 = arith.constant 0 : index
    %c0_60 = arith.constant 0 : index
    %c0_61 = arith.constant 0 : index
    %131 = vector.load %arg7[%c0_59, %c0_60, %c0_61] : memref<8x3x64xf32, #tpu.memory_space<vmem>>, vector<8x3x64xf32>
    tpu.vector_store %arg7[%c0_59, %c0_60, %c0_61], %130 {strides = array<i32>} : memref<8x3x64xf32, #tpu.memory_space<vmem>>, vector<8x3x64xf32>,
    %c0_62 = arith.constant 0 : index
    %c0_63 = arith.constant 0 : index
    %132 = vector.load %arg5[%c0_62, %c0_63] : memref<32x128xf32, #tpu.memory_space<vmem>>, vector<32x128xf32>
    %c0_64 = arith.constant 0 : index
    %c0_65 = arith.constant 0 : index
    %133 = vector.load %arg6[%c0_64, %c0_65] : memref<32x128xf32, #tpu.memory_space<vmem>>, vector<32x128xf32>
    %c0_66 = arith.constant 0 : index
    %c0_67 = arith.constant 0 : index
    %134 = vector.load %arg1[%c0_66, %c0_67] : memref<3x1xi32, #tpu.memory_space<vmem>>, vector<3x1xi32>
    %c0_68 = arith.constant 0 : index
    %135 = memref.load %arg2[%c0_68] : memref<1xi32, #tpu.memory_space<smem>>
    %cst_69 = arith.constant 0.000000e+00 : f32
    %136 = vector.broadcast %cst_69 : f32 to vector<3x32xf32>
    %c0_i32_70 = arith.constant 0 : i32
    %137 = arith.subi %135, %c0_i32_70 : i32
    %138 = arith.addi %c0_i32_70, %137 : i32
    %c1_i32_71 = arith.constant 1 : i32
    %139:4 = scf.for %arg10 = %c0_i32_70 to %138 step %c1_i32_71 iter_args(%arg11 = %136, %arg12 = %136, %arg13 = %136, %arg14 = %136) -> (vector<3x32xf32>, vector<3x32xf32>, vector<3x32xf32>, vector<3x32xf32>)  : i32 {
      %c1_i32_72 = arith.constant 1 : i32
      %140 = arith.subi %135, %c1_i32_72 : i32
      %141 = arith.subi %140, %arg10 : i32
      %142 = arith.index_cast %arg10 : i32 to index
      %c0_73 = arith.constant 0 : index
      %c0_74 = arith.constant 0 : index
      %143 = vector.load %arg8[%142, %c0_73, %c0_74] : memref<8x3x128xf32, #tpu.memory_space<vmem>>, vector<1x3x128xf32>
      %144 = vector.shape_cast %143 : vector<1x3x128xf32> to vector<3x128xf32>
      %cst_75 = arith.constant dense<0.000000e+00> : vector<3x128xf32>
      %145 = tpu.matmul %arg11, %132, %cst_75 {dimension_numbers = #tpu.dot_dimension_numbers<[1], [0], [0], [1], [0, 0, 1, 1], [], []>} : vector<3x32xf32>, vector<32x128xf32>, vector<3x128xf32> -> vector<3x128xf32>
      %146 = arith.addf %144, %145 : vector<3x128xf32>
      %147 = arith.negf %146 : vector<3x128xf32>
      %148 = math.exp %147 : vector<3x128xf32>
      %cst_76 = arith.constant 1.000000e+00 : f32
      %149 = vector.broadcast %cst_76 : f32 to vector<3x128xf32>
      %150 = arith.addf %149, %148 : vector<3x128xf32>
      %151 = arith.divf %149, %150 : vector<3x128xf32>
      %152 = math.tanh %146 : vector<3x128xf32>
      %153 = vector.extract_strided_slice %151 {offsets = [0, 0], sizes = [3, 32], strides = [1, 1]} : vector<3x128xf32> to vector<3x32xf32>
      %154 = vector.extract_strided_slice %151 {offsets = [0, 32], sizes = [3, 32], strides = [1, 1]} : vector<3x128xf32> to vector<3x32xf32>
      %155 = vector.extract_strided_slice %151 {offsets = [0, 96], sizes = [3, 32], strides = [1, 1]} : vector<3x128xf32> to vector<3x32xf32>
      %156 = vector.extract_strided_slice %152 {offsets = [0, 64], sizes = [3, 32], strides = [1, 1]} : vector<3x128xf32> to vector<3x32xf32>
      %157 = arith.mulf %154, %arg12 : vector<3x32xf32>
      %158 = arith.mulf %153, %156 : vector<3x32xf32>
      %159 = arith.addf %157, %158 : vector<3x32xf32>
      %160 = math.tanh %159 : vector<3x32xf32>
      %161 = arith.mulf %155, %160 : vector<3x32xf32>
      %162 = vector.broadcast %arg10 : i32 to vector<3x1xi32>
      %163 = arith.cmpi slt, %162, %134 : vector<3x1xi32>
      %164 = vector.shape_cast %163 : vector<3x1xi1> to vector<3x1xi1>
      %165 = vector.broadcast %164 : vector<3x1xi1> to vector<3x32xi1>
      %166 = arith.select %165, %161, %arg11 : vector<3x32xi1>, vector<3x32xf32>
      %167 = vector.shape_cast %163 : vector<3x1xi1> to vector<3x1xi1>
      %168 = vector.broadcast %167 : vector<3x1xi1> to vector<3x32xi1>
      %169 = arith.select %168, %159, %arg12 : vector<3x32xi1>, vector<3x32xf32>
      %cst_77 = arith.constant 0.000000e+00 : f32
      %170 = vector.shape_cast %163 : vector<3x1xi1> to vector<3x1xi1>
      %171 = vector.broadcast %170 : vector<3x1xi1> to vector<3x32xi1>
      %172 = vector.broadcast %cst_77 : f32 to vector<3x32xf32>
      %173 = arith.select %171, %166, %172 : vector<3x32xi1>, vector<3x32xf32>
      %174 = arith.index_cast %arg10 : i32 to index
      %c0_78 = arith.constant 0 : index
      %c0_79 = arith.constant 0 : index
      %175 = vector.load %arg7[%174, %c0_78, %c0_79] : memref<8x3x64xf32, #tpu.memory_space<vmem>>, vector<1x3x32xf32>
      %176 = vector.shape_cast %175 : vector<1x3x32xf32> to vector<3x32xf32>
      %177 = vector.shape_cast %173 : vector<3x32xf32> to vector<1x3x32xf32>
      tpu.vector_store %arg7[%174, %c0_78, %c0_79], %177 {strides = array<i32>} : memref<8x3x64xf32, #tpu.memory_space<vmem>>, vector<1x3x32xf32>,
      %178 = arith.index_cast %141 : i32 to index
      %c0_80 = arith.constant 0 : index
      %c0_81 = arith.constant 0 : index
      %179 = vector.load %arg9[%178, %c0_80, %c0_81] : memref<8x3x128xf32, #tpu.memory_space<vmem>>, vector<1x3x128xf32>
      %180 = vector.shape_cast %179 : vector<1x3x128xf32> to vector<3x128xf32>
      %cst_82 = arith.constant dense<0.000000e+00> : vector<3x128xf32>
      %181 = tpu.matmul %arg13, %133, %cst_82 {dimension_numbers = #tpu.dot_dimension_numbers<[1], [0], [0], [1], [0, 0, 1, 1], [], []>} : vector<3x32xf32>, vector<32x128xf32>, vector<3x128xf32> -> vector<3x128xf32>
      %182 = arith.addf %180, %181 : vector<3x128xf32>
      %183 = arith.negf %182 : vector<3x128xf32>
      %184 = math.exp %183 : vector<3x128xf32>
      %cst_83 = arith.constant 1.000000e+00 : f32
      %185 = vector.broadcast %cst_83 : f32 to vector<3x128xf32>
      %186 = arith.addf %185, %184 : vector<3x128xf32>
      %187 = arith.divf %185, %186 : vector<3x128xf32>
      %188 = math.tanh %182 : vector<3x128xf32>
      %189 = vector.extract_strided_slice %187 {offsets = [0, 0], sizes = [3, 32], strides = [1, 1]} : vector<3x128xf32> to vector<3x32xf32>
      %190 = vector.extract_strided_slice %187 {offsets = [0, 32], sizes = [3, 32], strides = [1, 1]} : vector<3x128xf32> to vector<3x32xf32>
      %191 = vector.extract_strided_slice %187 {offsets = [0, 96], sizes = [3, 32], strides = [1, 1]} : vector<3x128xf32> to vector<3x32xf32>
      %192 = vector.extract_strided_slice %188 {offsets = [0, 64], sizes = [3, 32], strides = [1, 1]} : vector<3x128xf32> to vector<3x32xf32>
      %193 = arith.mulf %190, %arg14 : vector<3x32xf32>
      %194 = arith.mulf %189, %192 : vector<3x32xf32>
      %195 = arith.addf %193, %194 : vector<3x32xf32>
      %196 = math.tanh %195 : vector<3x32xf32>
      %197 = arith.mulf %191, %196 : vector<3x32xf32>
      %198 = vector.broadcast %141 : i32 to vector<3x1xi32>
      %199 = arith.cmpi slt, %198, %134 : vector<3x1xi32>
      %200 = vector.shape_cast %199 : vector<3x1xi1> to vector<3x1xi1>
      %201 = vector.broadcast %200 : vector<3x1xi1> to vector<3x32xi1>
      %202 = arith.select %201, %197, %arg13 : vector<3x32xi1>, vector<3x32xf32>
      %203 = vector.shape_cast %199 : vector<3x1xi1> to vector<3x1xi1>
      %204 = vector.broadcast %203 : vector<3x1xi1> to vector<3x32xi1>
      %205 = arith.select %204, %195, %arg14 : vector<3x32xi1>, vector<3x32xf32>
      %cst_84 = arith.constant 0.000000e+00 : f32
      %206 = vector.shape_cast %199 : vector<3x1xi1> to vector<3x1xi1>
      %207 = vector.broadcast %206 : vector<3x1xi1> to vector<3x32xi1>
      %208 = vector.broadcast %cst_84 : f32 to vector<3x32xf32>
      %209 = arith.select %207, %202, %208 : vector<3x32xi1>, vector<3x32xf32>
      %210 = arith.index_cast %141 : i32 to index
      %c0_85 = arith.constant 0 : index
      %c32 = arith.constant 32 : index
      %211 = vector.load %arg7[%210, %c0_85, %c32] : memref<8x3x64xf32, #tpu.memory_space<vmem>>, vector<1x3x32xf32>
      %212 = vector.shape_cast %211 : vector<1x3x32xf32> to vector<3x32xf32>
      %213 = vector.shape_cast %209 : vector<3x32xf32> to vector<1x3x32xf32>
      tpu.vector_store %arg7[%210, %c0_85, %c32], %213 {strides = array<i32>} : memref<8x3x64xf32, #tpu.memory_space<vmem>>, vector<1x3x32xf32>,
      scf.yield %166, %169, %202, %205 : vector<3x32xf32>, vector<3x32xf32>, vector<3x32xf32>, vector<3x32xf32>
    }
    return
  }
}

</mosaic_0001>

<llo_original>
// kernel: lstm_wrapper_forward.1
$region0: #{lstm_wrapper_forward.1}
  #allocation0 [shape = 'u32[]', space=smem, size = 0x4, offset = 0x4, fixed_abs, tag = 'smem constant byte address 0x4 - core index']
  #allocation1 [shape = 'u32[72,128]{1,0:T(1,128)}', space=vmem, size = 0x9000, scoped, tag = 'internal scratch']
  #allocation2 [shape = 'f32[8,3,128]{2,1,0:T(4,128)}', space=vmem, size = 0x4000, scoped, tag = 'scratch operand']
  #allocation3 [shape = 'f32[8,3,128]{2,1,0:T(4,128)}', space=vmem, size = 0x4000, scoped, tag = 'scratch operand']
  #allocation4 [shape = 's32[1]{0:T(128)S(6)}', space=smem, size = 0x200, scoped, tag = 'scoped memory for lstm_wrapper_forward.1']
  %s0 = inlined_call_operand.vmem [shape: f32[8,3,4], index: 0, kind: input, shape index: {}]
  %s1 = inlined_call_operand.vmem [shape: s32[3,1], index: 1, kind: input, shape index: {}]
  %s2 = inlined_call_operand.<no memory space> [shape: s32[1], index: 2, kind: input, shape index: {}]
  %s3 = inlined_call_operand.vmem [shape: f32[4,256], index: 3, kind: input, shape index: {}]
  %s4 = inlined_call_operand.vmem [shape: f32[1,256], index: 4, kind: input, shape index: {}]
  %s5 = inlined_call_operand.vmem [shape: f32[32,128], index: 5, kind: input, shape index: {}]
  %s6 = inlined_call_operand.vmem [shape: f32[32,128], index: 6, kind: input, shape index: {}]
  %s7 = inlined_call_operand.vmem [shape: f32[8,3,64], index: 7, kind: output, shape index: {}]
  %s8 = sld [smem:[#allocation0]]
  $region45: #{lstm_wrapper_forward.1} parent=0
    _
  %s10 = ssub.s32 1, %s8
  %s11 = scalar_select 0, %s10, %s8
  %12 = sst [smem:[#allocation4]] %s2
  // Predicated region
  $region2: #{lstm_wrapper_forward.1} parent=0 // pred_check
    _
  $region3: #{lstm_wrapper_forward.1} parent=0 // pred_check_branch
    %14 = sbr.rel (0) target = $region5
  $region4: #{lstm_wrapper_forward.1} parent=0 // pred_region
    _
  $region5: #{lstm_wrapper_forward.1} parent=0 // pred_fallthru
    _
  // Predicated region
  $region6: #{lstm_wrapper_forward.1} parent=0 // pred_check
    _
  $region7: #{lstm_wrapper_forward.1} parent=0 // pred_check_branch
    %16 = sbr.rel (0) target = $region9
  $region8: #{lstm_wrapper_forward.1} parent=0 // pred_region
    _
  $region9: #{lstm_wrapper_forward.1} parent=0 // pred_fallthru
    _
  // Predicated region
  $region10: #{lstm_wrapper_forward.1} parent=0 // pred_check
    _
  $region11: #{lstm_wrapper_forward.1} parent=0 // pred_check_branch
    %18 = sbr.rel (0) target = $region13
  $region12: #{lstm_wrapper_forward.1} parent=0 // pred_region
    _
  $region13: #{lstm_wrapper_forward.1} parent=0 // pred_fallthru
    _
  // Predicated region
  $region14: #{lstm_wrapper_forward.1} parent=0 // pred_check
    _
  $region15: #{lstm_wrapper_forward.1} parent=0 // pred_check_branch
    %20 = sbr.rel (0) target = $region17
  $region16: #{lstm_wrapper_forward.1} parent=0 // pred_region
    _
  $region17: #{lstm_wrapper_forward.1} parent=0 // pred_fallthru
    _
  // Predicated region
  $region18: #{lstm_wrapper_forward.1} parent=0 // pred_check
    _
  $region19: #{lstm_wrapper_forward.1} parent=0 // pred_check_branch
    %22 = sbr.rel (0) target = $region21
  $region20: #{lstm_wrapper_forward.1} parent=0 // pred_region
    _
  $region21: #{lstm_wrapper_forward.1} parent=0 // pred_fallthru
    _
  // Predicated region
  $region22: #{lstm_wrapper_forward.1} parent=0 // pred_check
    _
  $region23: #{lstm_wrapper_forward.1} parent=0 // pred_check_branch
    %24 = sbr.rel (0) target = $region25
  $region24: #{lstm_wrapper_forward.1} parent=0 // pred_region
    _
  $region25: #{lstm_wrapper_forward.1} parent=0 // pred_fallthru
    _
  // Predicated region
  $region26: #{lstm_wrapper_forward.1} parent=0 // pred_check
    _
  $region27: #{lstm_wrapper_forward.1} parent=0 // pred_check_branch
    %26 = sbr.rel (0) target = $region29
  $region28: #{lstm_wrapper_forward.1} parent=0 // pred_region
    _
  $region29: #{lstm_wrapper_forward.1} parent=0 // pred_fallthru
    _
  %v27 = vld [vmem:[%s3] sm:$0xff]
  %v28 = vld [vmem:[%s4] sm:$0x3]
  %v29 = vld [vmem:[%s0] sm:$0x7]
  %v31 = vperm.slane %v28, 0
  %v32 = vperm.slane %v28, 1
  %36 = vst [vmem:[#allocation1] ss:$2 sm:$0xff] %v27
  %v37 = vld.sshfl [vmem:[#allocation1] sm:$0xff pattern:$0x75316420]
  %v38 = vld.sshfl [vmem:[#allocation1 + $0x8] sm:$0xff pattern:$0x75316420]
  %vm39 = vcmask 31744
  %v41 = vsel %vm39, %v29, 0
  %vm43 = vcmask 1043456
  %v44 = vsel %vm43, %v37, 0
  %v46 = vsel %vm43, %v38, 0
  %48 = vmatpush.msra.mxu0 0.0
  %49 = vmatpush.msra.mxu0 0.0
  %50 = vmatpush.msra.mxu0 0.0
  %51 = vmatpush.msra.mxu0 0.0
  %52 = vmatpush.msra.mxu0 0.0
  %53 = vmatpush.msra.mxu0 0.0
  %54 = vmatpush.msra.mxu0 0.0
  %55 = vmatpush.msra.mxu0 0.0
  %56 = vmatpush.msra.mxu0 0.0
  %57 = vmatpush.msra.mxu0 0.0
  %58 = vmatpush.msra.mxu0 0.0
  %59 = vmatpush.msra.mxu0 0.0
  %60 = vmatpush.msra.mxu0 0.0
  %61 = vmatpush.msra.mxu0 0.0
  %62 = vmatpush.msra.mxu0 0.0
  %63 = vmatpush.msra.mxu0 %v44
  %64 = vmatmul.f32.gmra.mxu0 %v41
  %v65 = vpop.f32.mrf.mxu0
  %v66 = vadd.f32 %v31, %v65
  %67 = vdwg.mxu0
  %68 = vmatpush.msra.mxu0 0.0
  %69 = vmatpush.msra.mxu0 0.0
  %70 = vmatpush.msra.mxu0 0.0
  %71 = vmatpush.msra.mxu0 0.0
  %72 = vmatpush.msra.mxu0 0.0
  %73 = vmatpush.msra.mxu0 0.0
  %74 = vmatpush.msra.mxu0 0.0
  %75 = vmatpush.msra.mxu0 0.0
  %76 = vmatpush.msra.mxu0 0.0
  %77 = vmatpush.msra.mxu0 0.0
  %78 = vmatpush.msra.mxu0 0.0
  %79 = vmatpush.msra.mxu0 0.0
  %80 = vmatpush.msra.mxu0 0.0
  %81 = vmatpush.msra.mxu0 0.0
  %82 = vmatpush.msra.mxu0 0.0
  %83 = vmatpush.msra.mxu0 %v46
  %84 = vmatmul.f32.gmra.mxu0 %v41
  %v85 = vpop.f32.mrf.mxu0
  %v86 = vadd.f32 %v32, %v85
  %87 = vdwg.mxu0
  %88 = vst [vmem:[#allocation2] sm:$0x7] %v66
  %89 = vst [vmem:[#allocation3] sm:$0x7] %v86
  %s90 = scalar_lea.vmem %s0, 4
  %v91 = vld [vmem:[%s90] sm:$0x7]
  %92 = vst [vmem:[#allocation1] ss:$2 sm:$0xff] %v27
  %v93 = vld.sshfl [vmem:[#allocation1] sm:$0xff pattern:$0x75316420]
  %v94 = vld.sshfl [vmem:[#allocation1 + $0x8] sm:$0xff pattern:$0x75316420]
  %v96 = vsel %vm39, %v91, 0
  %v98 = vsel %vm43, %v93, 0
  %v100 = vsel %vm43, %v94, 0
  %102 = vmatpush.msra.mxu0 0.0
  %103 = vmatpush.msra.mxu0 0.0
  %104 = vmatpush.msra.mxu0 0.0
  %105 = vmatpush.msra.mxu0 0.0
  %106 = vmatpush.msra.mxu0 0.0
  %107 = vmatpush.msra.mxu0 0.0
  %108 = vmatpush.msra.mxu0 0.0
  %109 = vmatpush.msra.mxu0 0.0
  %110 = vmatpush.msra.mxu0 0.0
  %111 = vmatpush.msra.mxu0 0.0
  %112 = vmatpush.msra.mxu0 0.0
  %113 = vmatpush.msra.mxu0 0.0
  %114 = vmatpush.msra.mxu0 0.0
  %115 = vmatpush.msra.mxu0 0.0
  %116 = vmatpush.msra.mxu0 0.0
  %117 = vmatpush.msra.mxu0 %v98
  %118 = vmatmul.f32.gmra.mxu0 %v96
  %v119 = vpop.f32.mrf.mxu0
  %v120 = vadd.f32 %v31, %v119
  %121 = vdwg.mxu0
  %122 = vmatpush.msra.mxu0 0.0
  %123 = vmatpush.msra.mxu0 0.0
  %124 = vmatpush.msra.mxu0 0.0
  %125 = vmatpush.msra.mxu0 0.0
  %126 = vmatpush.msra.mxu0 0.0
  %127 = vmatpush.msra.mxu0 0.0
  %128 = vmatpush.msra.mxu0 0.0
  %129 = vmatpush.msra.mxu0 0.0
  %130 = vmatpush.msra.mxu0 0.0
  %131 = vmatpush.msra.mxu0 0.0
  %132 = vmatpush.msra.mxu0 0.0
  %133 = vmatpush.msra.mxu0 0.0
  %134 = vmatpush.msra.mxu0 0.0
  %135 = vmatpush.msra.mxu0 0.0
  %136 = vmatpush.msra.mxu0 0.0
  %137 = vmatpush.msra.mxu0 %v100
  %138 = vmatmul.f32.gmra.mxu0 %v96
  %v139 = vpop.f32.mrf.mxu0
  %v140 = vadd.f32 %v32, %v139
  %141 = vdwg.mxu0
  %s142 = scalar_lea.vmem [#allocation2], 4
  %143 = vst [vmem:[%s142] sm:$0x7] %v120
  %s144 = scalar_lea.vmem [#allocation3], 4
  %145 = vst [vmem:[%s144] sm:$0x7] %v140
  %s146 = scalar_lea.vmem %s0, 8
  %v147 = vld [vmem:[%s146] sm:$0x7]
  %148 = vst [vmem:[#allocation1] ss:$2 sm:$0xff] %v27
  %v149 = vld.sshfl [vmem:[#allocation1] sm:$0xff pattern:$0x75316420]
  %v150 = vld.sshfl [vmem:[#allocation1 + $0x8] sm:$0xff pattern:$0x75316420]
  %v152 = vsel %vm39, %v147, 0
  %v154 = vsel %vm43, %v149, 0
  %v156 = vsel %vm43, %v150, 0
  %158 = vmatpush.msra.mxu0 0.0
  %159 = vmatpush.msra.mxu0 0.0
  %160 = vmatpush.msra.mxu0 0.0
  %161 = vmatpush.msra.mxu0 0.0
  %162 = vmatpush.msra.mxu0 0.0
  %163 = vmatpush.msra.mxu0 0.0
  %164 = vmatpush.msra.mxu0 0.0
  %165 = vmatpush.msra.mxu0 0.0
  %166 = vmatpush.msra.mxu0 0.0
  %167 = vmatpush.msra.mxu0 0.0
  %168 = vmatpush.msra.mxu0 0.0
  %169 = vmatpush.msra.mxu0 0.0
  %170 = vmatpush.msra.mxu0 0.0
  %171 = vmatpush.msra.mxu0 0.0
  %172 = vmatpush.msra.mxu0 0.0
  %173 = vmatpush.msra.mxu0 %v154
  %174 = vmatmul.f32.gmra.mxu0 %v152
  %v175 = vpop.f32.mrf.mxu0
  %v176 = vadd.f32 %v31, %v175
  %177 = vdwg.mxu0
  %178 = vmatpush.msra.mxu0 0.0
  %179 = vmatpush.msra.mxu0 0.0
  %180 = vmatpush.msra.mxu0 0.0
  %181 = vmatpush.msra.mxu0 0.0
  %182 = vmatpush.msra.mxu0 0.0
  %183 = vmatpush.msra.mxu0 0.0
  %184 = vmatpush.msra.mxu0 0.0
  %185 = vmatpush.msra.mxu0 0.0
  %186 = vmatpush.msra.mxu0 0.0
  %187 = vmatpush.msra.mxu0 0.0
  %188 = vmatpush.msra.mxu0 0.0
  %189 = vmatpush.msra.mxu0 0.0
  %190 = vmatpush.msra.mxu0 0.0
  %191 = vmatpush.msra.mxu0 0.0
  %192 = vmatpush.msra.mxu0 0.0
  %193 = vmatpush.msra.mxu0 %v156
  %194 = vmatmul.f32.gmra.mxu0 %v152
  %v195 = vpop.f32.mrf.mxu0
  %v196 = vadd.f32 %v32, %v195
  %197 = vdwg.mxu0
  %s198 = scalar_lea.vmem [#allocation2], 8
  %199 = vst [vmem:[%s198] sm:$0x7] %v176
  %s200 = scalar_lea.vmem [#allocation3], 8
  %201 = vst [vmem:[%s200] sm:$0x7] %v196
  %s202 = scalar_lea.vmem %s0, 12
  %v203 = vld [vmem:[%s202] sm:$0x7]
  %204 = vst [vmem:[#allocation1] ss:$2 sm:$0xff] %v27
  %v205 = vld.sshfl [vmem:[#allocation1] sm:$0xff pattern:$0x75316420]
  %v206 = vld.sshfl [vmem:[#allocation1 + $0x8] sm:$0xff pattern:$0x75316420]
  %v208 = vsel %vm39, %v203, 0
  %v210 = vsel %vm43, %v205, 0
  %v212 = vsel %vm43, %v206, 0
  %214 = vmatpush.msra.mxu0 0.0
  %215 = vmatpush.msra.mxu0 0.0
  %216 = vmatpush.msra.mxu0 0.0
  %217 = vmatpush.msra.mxu0 0.0
  %218 = vmatpush.msra.mxu0 0.0
  %219 = vmatpush.msra.mxu0 0.0
  %220 = vmatpush.msra.mxu0 0.0
  %221 = vmatpush.msra.mxu0 0.0
  %222 = vmatpush.msra.mxu0 0.0
  %223 = vmatpush.msra.mxu0 0.0
  %224 = vmatpush.msra.mxu0 0.0
  %225 = vmatpush.msra.mxu0 0.0
  %226 = vmatpush.msra.mxu0 0.0
  %227 = vmatpush.msra.mxu0 0.0
  %228 = vmatpush.msra.mxu0 0.0
  %229 = vmatpush.msra.mxu0 %v210
  %230 = vmatmul.f32.gmra.mxu0 %v208
  %v231 = vpop.f32.mrf.mxu0
  %v232 = vadd.f32 %v31, %v231
  %233 = vdwg.mxu0
  %234 = vmatpush.msra.mxu0 0.0
  %235 = vmatpush.msra.mxu0 0.0
  %236 = vmatpush.msra.mxu0 0.0
  %237 = vmatpush.msra.mxu0 0.0
  %238 = vmatpush.msra.mxu0 0.0
  %239 = vmatpush.msra.mxu0 0.0
  %240 = vmatpush.msra.mxu0 0.0
  %241 = vmatpush.msra.mxu0 0.0
  %242 = vmatpush.msra.mxu0 0.0
  %243 = vmatpush.msra.mxu0 0.0
  %244 = vmatpush.msra.mxu0 0.0
  %245 = vmatpush.msra.mxu0 0.0
  %246 = vmatpush.msra.mxu0 0.0
  %247 = vmatpush.msra.mxu0 0.0
  %248 = vmatpush.msra.mxu0 0.0
  %249 = vmatpush.msra.mxu0 %v212
  %250 = vmatmul.f32.gmra.mxu0 %v208
  %v251 = vpop.f32.mrf.mxu0
  %v252 = vadd.f32 %v32, %v251
  %253 = vdwg.mxu0
  %s254 = scalar_lea.vmem [#allocation2], 12
  %255 = vst [vmem:[%s254] sm:$0x7] %v232
  %s256 = scalar_lea.vmem [#allocation3], 12
  %257 = vst [vmem:[%s256] sm:$0x7] %v252
  %s258 = scalar_lea.vmem %s0, 16
  %v259 = vld [vmem:[%s258] sm:$0x7]
  %260 = vst [vmem:[#allocation1] ss:$2 sm:$0xff] %v27
  %v261 = vld.sshfl [vmem:[#allocation1] sm:$0xff pattern:$0x75316420]
  %v262 = vld.sshfl [vmem:[#allocation1 + $0x8] sm:$0xff pattern:$0x75316420]
  %v264 = vsel %vm39, %v259, 0
  %v266 = vsel %vm43, %v261, 0
  %v268 = vsel %vm43, %v262, 0
  %270 = vmatpush.msra.mxu0 0.0
  %271 = vmatpush.msra.mxu0 0.0
  %272 = vmatpush.msra.mxu0 0.0
  %273 = vmatpush.msra.mxu0 0.0
  %274 = vmatpush.msra.mxu0 0.0
  %275 = vmatpush.msra.mxu0 0.0
  %276 = vmatpush.msra.mxu0 0.0
  %277 = vmatpush.msra.mxu0 0.0
  %278 = vmatpush.msra.mxu0 0.0
  %279 = vmatpush.msra.mxu0 0.0
  %280 = vmatpush.msra.mxu0 0.0
  %281 = vmatpush.msra.mxu0 0.0
  %282 = vmatpush.msra.mxu0 0.0
  %283 = vmatpush.msra.mxu0 0.0
  %284 = vmatpush.msra.mxu0 0.0
  %285 = vmatpush.msra.mxu0 %v266
  %286 = vmatmul.f32.gmra.mxu0 %v264
  %v287 = vpop.f32.mrf.mxu0
  %v288 = vadd.f32 %v31, %v287
  %289 = vdwg.mxu0
  %290 = vmatpush.msra.mxu0 0.0
  %291 = vmatpush.msra.mxu0 0.0
  %292 = vmatpush.msra.mxu0 0.0
  %293 = vmatpush.msra.mxu0 0.0
  %294 = vmatpush.msra.mxu0 0.0
  %295 = vmatpush.msra.mxu0 0.0
  %296 = vmatpush.msra.mxu0 0.0
  %297 = vmatpush.msra.mxu0 0.0
  %298 = vmatpush.msra.mxu0 0.0
  %299 = vmatpush.msra.mxu0 0.0
  %300 = vmatpush.msra.mxu0 0.0
  %301 = vmatpush.msra.mxu0 0.0
  %302 = vmatpush.msra.mxu0 0.0
  %303 = vmatpush.msra.mxu0 0.0
  %304 = vmatpush.msra.mxu0 0.0
  %305 = vmatpush.msra.mxu0 %v268
  %306 = vmatmul.f32.gmra.mxu0 %v264
  %v307 = vpop.f32.mrf.mxu0
  %v308 = vadd.f32 %v32, %v307
  %309 = vdwg.mxu0
  %s310 = scalar_lea.vmem [#allocation2], 16
  %311 = vst [vmem:[%s310] sm:$0x7] %v288
  %s312 = scalar_lea.vmem [#allocation3], 16
  %313 = vst [vmem:[%s312] sm:$0x7] %v308
  %s314 = scalar_lea.vmem %s0, 20
  %v315 = vld [vmem:[%s314] sm:$0x7]
  %316 = vst [vmem:[#allocation1] ss:$2 sm:$0xff] %v27
  %v317 = vld.sshfl [vmem:[#allocation1] sm:$0xff pattern:$0x75316420]
  %v318 = vld.sshfl [vmem:[#allocation1 + $0x8] sm:$0xff pattern:$0x75316420]
  %v320 = vsel %vm39, %v315, 0
  %v322 = vsel %vm43, %v317, 0
  %v324 = vsel %vm43, %v318, 0
  %326 = vmatpush.msra.mxu0 0.0
  %327 = vmatpush.msra.mxu0 0.0
  %328 = vmatpush.msra.mxu0 0.0
  %329 = vmatpush.msra.mxu0 0.0
  %330 = vmatpush.msra.mxu0 0.0
  %331 = vmatpush.msra.mxu0 0.0
  %332 = vmatpush.msra.mxu0 0.0
  %333 = vmatpush.msra.mxu0 0.0
  %334 = vmatpush.msra.mxu0 0.0
  %335 = vmatpush.msra.mxu0 0.0
  %336 = vmatpush.msra.mxu0 0.0
  %337 = vmatpush.msra.mxu0 0.0
  %338 = vmatpush.msra.mxu0 0.0
  %339 = vmatpush.msra.mxu0 0.0
  %340 = vmatpush.msra.mxu0 0.0
  %341 = vmatpush.msra.mxu0 %v322
  %342 = vmatmul.f32.gmra.mxu0 %v320
  %v343 = vpop.f32.mrf.mxu0
  %v344 = vadd.f32 %v31, %v343
  %345 = vdwg.mxu0
  %346 = vmatpush.msra.mxu0 0.0
  %347 = vmatpush.msra.mxu0 0.0
  %348 = vmatpush.msra.mxu0 0.0
  %349 = vmatpush.msra.mxu0 0.0
  %350 = vmatpush.msra.mxu0 0.0
  %351 = vmatpush.msra.mxu0 0.0
  %352 = vmatpush.msra.mxu0 0.0
  %353 = vmatpush.msra.mxu0 0.0
  %354 = vmatpush.msra.mxu0 0.0
  %355 = vmatpush.msra.mxu0 0.0
  %356 = vmatpush.msra.mxu0 0.0
  %357 = vmatpush.msra.mxu0 0.0
  %358 = vmatpush.msra.mxu0 0.0
  %359 = vmatpush.msra.mxu0 0.0
  %360 = vmatpush.msra.mxu0 0.0
  %361 = vmatpush.msra.mxu0 %v324
  %362 = vmatmul.f32.gmra.mxu0 %v320
  %v363 = vpop.f32.mrf.mxu0
  %v364 = vadd.f32 %v32, %v363
  %365 = vdwg.mxu0
  %s366 = scalar_lea.vmem [#allocation2], 20
  %367 = vst [vmem:[%s366] sm:$0x7] %v344
  %s368 = scalar_lea.vmem [#allocation3], 20
  %369 = vst [vmem:[%s368] sm:$0x7] %v364
  %s370 = scalar_lea.vmem %s0, 24
  %v371 = vld [vmem:[%s370] sm:$0x7]
  %372 = vst [vmem:[#allocation1] ss:$2 sm:$0xff] %v27
  %v373 = vld.sshfl [vmem:[#allocation1] sm:$0xff pattern:$0x75316420]
  %v374 = vld.sshfl [vmem:[#allocation1 + $0x8] sm:$0xff pattern:$0x75316420]
  %v376 = vsel %vm39, %v371, 0
  %v378 = vsel %vm43, %v373, 0
  %v380 = vsel %vm43, %v374, 0
  %382 = vmatpush.msra.mxu0 0.0
  %383 = vmatpush.msra.mxu0 0.0
  %384 = vmatpush.msra.mxu0 0.0
  %385 = vmatpush.msra.mxu0 0.0
  %386 = vmatpush.msra.mxu0 0.0
  %387 = vmatpush.msra.mxu0 0.0
  %388 = vmatpush.msra.mxu0 0.0
  %389 = vmatpush.msra.mxu0 0.0
  %390 = vmatpush.msra.mxu0 0.0
  %391 = vmatpush.msra.mxu0 0.0
  %392 = vmatpush.msra.mxu0 0.0
  %393 = vmatpush.msra.mxu0 0.0
  %394 = vmatpush.msra.mxu0 0.0
  %395 = vmatpush.msra.mxu0 0.0
  %396 = vmatpush.msra.mxu0 0.0
  %397 = vmatpush.msra.mxu0 %v378
  %398 = vmatmul.f32.gmra.mxu0 %v376
  %v399 = vpop.f32.mrf.mxu0
  %v400 = vadd.f32 %v31, %v399
  %401 = vdwg.mxu0
  %402 = vmatpush.msra.mxu0 0.0
  %403 = vmatpush.msra.mxu0 0.0
  %404 = vmatpush.msra.mxu0 0.0
  %405 = vmatpush.msra.mxu0 0.0
  %406 = vmatpush.msra.mxu0 0.0
  %407 = vmatpush.msra.mxu0 0.0
  %408 = vmatpush.msra.mxu0 0.0
  %409 = vmatpush.msra.mxu0 0.0
  %410 = vmatpush.msra.mxu0 0.0
  %411 = vmatpush.msra.mxu0 0.0
  %412 = vmatpush.msra.mxu0 0.0
  %413 = vmatpush.msra.mxu0 0.0
  %414 = vmatpush.msra.mxu0 0.0
  %415 = vmatpush.msra.mxu0 0.0
  %416 = vmatpush.msra.mxu0 0.0
  %417 = vmatpush.msra.mxu0 %v380
  %418 = vmatmul.f32.gmra.mxu0 %v376
  %v419 = vpop.f32.mrf.mxu0
  %v420 = vadd.f32 %v32, %v419
  %421 = vdwg.mxu0
  %s422 = scalar_lea.vmem [#allocation2], 24
  %423 = vst [vmem:[%s422] sm:$0x7] %v400
  %s424 = scalar_lea.vmem [#allocation3], 24
  %425 = vst [vmem:[%s424] sm:$0x7] %v420
  %s426 = scalar_lea.vmem %s0, 28
  %v427 = vld [vmem:[%s426] sm:$0x7]
  %428 = vst [vmem:[#allocation1] ss:$2 sm:$0xff] %v27
  %v429 = vld.sshfl [vmem:[#allocation1] sm:$0xff pattern:$0x75316420]
  %v430 = vld.sshfl [vmem:[#allocation1 + $0x8] sm:$0xff pattern:$0x75316420]
  %v432 = vsel %vm39, %v427, 0
  %v434 = vsel %vm43, %v429, 0
  %v436 = vsel %vm43, %v430, 0
  %438 = vmatpush.msra.mxu0 0.0
  %439 = vmatpush.msra.mxu0 0.0
  %440 = vmatpush.msra.mxu0 0.0
  %441 = vmatpush.msra.mxu0 0.0
  %442 = vmatpush.msra.mxu0 0.0
  %443 = vmatpush.msra.mxu0 0.0
  %444 = vmatpush.msra.mxu0 0.0
  %445 = vmatpush.msra.mxu0 0.0
  %446 = vmatpush.msra.mxu0 0.0
  %447 = vmatpush.msra.mxu0 0.0
  %448 = vmatpush.msra.mxu0 0.0
  %449 = vmatpush.msra.mxu0 0.0
  %450 = vmatpush.msra.mxu0 0.0
  %451 = vmatpush.msra.mxu0 0.0
  %452 = vmatpush.msra.mxu0 0.0
  %453 = vmatpush.msra.mxu0 %v434
  %454 = vmatmul.f32.gmra.mxu0 %v432
  %v455 = vpop.f32.mrf.mxu0
  %v456 = vadd.f32 %v31, %v455
  %457 = vdwg.mxu0
  %458 = vmatpush.msra.mxu0 0.0
  %459 = vmatpush.msra.mxu0 0.0
  %460 = vmatpush.msra.mxu0 0.0
  %461 = vmatpush.msra.mxu0 0.0
  %462 = vmatpush.msra.mxu0 0.0
  %463 = vmatpush.msra.mxu0 0.0
  %464 = vmatpush.msra.mxu0 0.0
  %465 = vmatpush.msra.mxu0 0.0
  %466 = vmatpush.msra.mxu0 0.0
  %467 = vmatpush.msra.mxu0 0.0
  %468 = vmatpush.msra.mxu0 0.0
  %469 = vmatpush.msra.mxu0 0.0
  %470 = vmatpush.msra.mxu0 0.0
  %471 = vmatpush.msra.mxu0 0.0
  %472 = vmatpush.msra.mxu0 0.0
  %473 = vmatpush.msra.mxu0 %v436
  %474 = vmatmul.f32.gmra.mxu0 %v432
  %v475 = vpop.f32.mrf.mxu0
  %v476 = vadd.f32 %v32, %v475
  %477 = vdwg.mxu0
  %s478 = scalar_lea.vmem [#allocation2], 28
  %479 = vst [vmem:[%s478] sm:$0x7] %v456
  %s480 = scalar_lea.vmem [#allocation3], 28
  %481 = vst [vmem:[%s480] sm:$0x7] %v476
  %vm482 = vcmask 518144
  %483 = vst.msk [vmem:[%s7] sm:$0x7] %vm482, 0.0
  %484 = vst.msk [vmem:[%s7 + $0x4] sm:$0x7] %vm482, 0.0
  %485 = vst.msk [vmem:[%s7 + $0x8] sm:$0x7] %vm482, 0.0
  %486 = vst.msk [vmem:[%s7 + $0xc] sm:$0x7] %vm482, 0.0
  %487 = vst.msk [vmem:[%s7 + $0x10] sm:$0x7] %vm482, 0.0
  %488 = vst.msk [vmem:[%s7 + $0x14] sm:$0x7] %vm482, 0.0
  %489 = vst.msk [vmem:[%s7 + $0x18] sm:$0x7] %vm482, 0.0
  %490 = vst.msk [vmem:[%s7 + $0x1c] sm:$0x7] %vm482, 0.0
  %v491 = vld [vmem:[%s5] sm:$0xff]
  %v492 = vld [vmem:[%s5 + $0x8] sm:$0xff]
  %v493 = vld [vmem:[%s5 + $0x10] sm:$0xff]
  %v494 = vld [vmem:[%s5 + $0x18] sm:$0xff]
  %v495 = vld [vmem:[%s6] sm:$0xff]
  %v496 = vld [vmem:[%s6 + $0x8] sm:$0xff]
  %v497 = vld [vmem:[%s6 + $0x10] sm:$0xff]
  %v498 = vld [vmem:[%s6 + $0x18] sm:$0xff]
  %v499 = vld [vmem:[%s1] sm:$0x7]
  %s500 = sld [smem:[#allocation4]]
  // While loop
  $region30: #{lstm_wrapper_forward.1} parent=0 // loop_pre_header
    _
  $region31: #{lstm_wrapper_forward.1} parent=0 // loop_header
    %s502 = sphi 0, %s504
    %p503 = scmp.ge.s32.totalorder %s502, %s500
    %v507 = vphi 0.0, %v587
    %v508 = vphi 0.0, %v588
    %v509 = vphi 0.0, %v670
    %v510 = vphi 0.0, %v671
  $region32: #{lstm_wrapper_forward.1} parent=0 // loop_header_branch
    %506 = sbr.rel (%p503) target = $region36
  $region33: #{lstm_wrapper_forward.1} parent=0 // loop_body
    %s511 = ssub.s32 %s500, 1
    %s512 = ssub.s32 %s511, %s502
    %s513 = smul.u32 %s502, 4
    %s514 = scalar_lea.vmem [#allocation2], %s513
    %v515 = vld [vmem:[%s514] sm:$0x7]
    %517 = vrot.lane.b32.xlu0 %v507, 32
    %v518 = vpop.permute.xlu0 %517
    %vm519 = vcmask 261120
    %v520 = vsel %vm519, %v518, 0
    %522 = vmatpush.msra.mxu0 0.0
    %523 = vmatpush.msra.mxu0 0.0
    %524 = vmatpush.msra.mxu0 0.0
    %525 = vmatpush.msra.mxu0 0.0
    %526 = vmatpush.msra.mxu0 0.0
    %527 = vmatpush.msra.mxu0 0.0
    %528 = vmatpush.msra.mxu0 0.0
    %529 = vmatpush.msra.mxu0 0.0
    %530 = vmatpush.msra.mxu0 0.0
    %531 = vmatpush.msra.mxu0 0.0
    %532 = vmatpush.msra.mxu0 0.0
    %533 = vmatpush.msra.mxu0 0.0
    %534 = vmatpush.msra.mxu0 %v494
    %535 = vmatpush.msra.mxu0 %v493
    %536 = vmatpush.msra.mxu0 %v492
    %537 = vmatpush.msra.mxu0 %v491
    %538 = vmatmul.f32.gmra.mxu0 %v520
    %v539 = vpop.f32.mrf.mxu0
    %v540 = vadd.f32 0.0, %v539
    %541 = vdwg.mxu0
    %v542 = vadd.f32 %v515, %v540
    %v543 = vxor.u32 %v542, 2147483648
    %v544 = vmul.f32 %v543, 1.442695
    %v545 = vpow.pop %v544
    %v546 = vadd.f32 %v545, 1.0
    %v547 = vrcp.pop %v546
    %v548 = vmul.f32 %v546, %v547
    %v549 = vsub.f32 1.0, %v548
    %v550 = vmul.f32 %v547, %v549
    %v551 = vadd.f32 %v547, %v550
    %vm552 = vweird.f32 %v546
    %vm553 = vweird.f32 %v547
    %vm554 = vmor %vm552, %vm553
    %v555 = vsel %vm554, %v547, %v551
    %v556 = vand.u32 2147483647, %v546
    %vm557 = vcmp.eq.f32.partialorder %v556, 8.507059e+37
    %v558 = vand.u32 %v546, 2147483648
    %v559 = vor.u32 1.1754944e-38, %v558
    %v560 = vsel %vm557, %v559, %v555
    %v561 = vmul.f32 1.0, %v560
    %v562 = vtanh.pop %v542
    %v563 = vmul.f32 %v561, %v508
    %565 = vrot.lane.b32.xlu0 %v562, 64
    %v566 = vpop.permute.xlu0 %565
    %v568 = vmul.f32 %v561, %v566
    %570 = vrot.lane.b32.xlu0 %v568, 32
    %v571 = vpop.permute.xlu0 %570
    %v573 = vadd.f32 %v563, %v571
    %v574 = vtanh.pop %v573
    %576 = vrot.lane.b32.xlu0 %v574, 64
    %v577 = vpop.permute.xlu0 %576
    %v579 = vmul.f32 %v561, %v577
    %v580 = vstv %s502
    %vm581 = vcmp.lt.s32.totalorder %v580, %v499
    %v582 = vsel %vm581, 1, 0
    %583 = vset.pattern.permute.xlu0 0
    %584 = vperm.xlu0 %583, %v582
    %v585 = vpop.permute.xlu0 %584
    %vm586 = vcmp.eq.s32.totalorder %v585, 1
    %v587 = vsel %vm586, %v579, %v507
    %v588 = vsel %vm586, %v573, %v508
    %v589 = vsel %vm586, %v579, 0.0
    %591 = vrot.lane.b32.xlu0 %v589, 32
    %v592 = vpop.permute.xlu0 %591
    %s594 = scalar_lea.vmem %s7, %s513
    %vm595 = vcmask 256000
    %596 = vst.msk [vmem:[%s594] sm:$0x7] %vm595, %v592
    %s597 = smul.u32 %s512, 4
    %s598 = scalar_lea.vmem [#allocation3], %s597
    %v599 = vld [vmem:[%s598] sm:$0x7]
    %601 = vrot.lane.b32.xlu0 %v509, 32
    %v602 = vpop.permute.xlu0 %601
    %v603 = vsel %vm519, %v602, 0
    %605 = vmatpush.msra.mxu0 0.0
    %606 = vmatpush.msra.mxu0 0.0
    %607 = vmatpush.msra.mxu0 0.0
    %608 = vmatpush.msra.mxu0 0.0
    %609 = vmatpush.msra.mxu0 0.0
    %610 = vmatpush.msra.mxu0 0.0
    %611 = vmatpush.msra.mxu0 0.0
    %612 = vmatpush.msra.mxu0 0.0
    %613 = vmatpush.msra.mxu0 0.0
    %614 = vmatpush.msra.mxu0 0.0
    %615 = vmatpush.msra.mxu0 0.0
    %616 = vmatpush.msra.mxu0 0.0
    %617 = vmatpush.msra.mxu0 %v498
    %618 = vmatpush.msra.mxu0 %v497
    %619 = vmatpush.msra.mxu0 %v496
    %620 = vmatpush.msra.mxu0 %v495
    %621 = vmatmul.f32.gmra.mxu0 %v603
    %v622 = vpop.f32.mrf.mxu0
    %v623 = vadd.f32 0.0, %v622
    %624 = vdwg.mxu0
    %v625 = vadd.f32 %v599, %v623
    %v626 = vxor.u32 %v625, 2147483648
    %v627 = vmul.f32 %v626, 1.442695
    %v628 = vpow.pop %v627
    %v629 = vadd.f32 %v628, 1.0
    %v630 = vrcp.pop %v629
    %v631 = vmul.f32 %v629, %v630
    %v632 = vsub.f32 1.0, %v631
    %v633 = vmul.f32 %v630, %v632
    %v634 = vadd.f32 %v630, %v633
    %vm635 = vweird.f32 %v629
    %vm636 = vweird.f32 %v630
    %vm637 = vmor %vm635, %vm636
    %v638 = vsel %vm637, %v630, %v634
    %v639 = vand.u32 2147483647, %v629
    %vm640 = vcmp.eq.f32.partialorder %v639, 8.507059e+37
    %v641 = vand.u32 %v629, 2147483648
    %v642 = vor.u32 1.1754944e-38, %v641
    %v643 = vsel %vm640, %v642, %v638
    %v644 = vmul.f32 1.0, %v643
    %v645 = vtanh.pop %v625
    %v646 = vmul.f32 %v644, %v510
    %648 = vrot.lane.b32.xlu0 %v645, 64
    %v649 = vpop.permute.xlu0 %648
    %v651 = vmul.f32 %v644, %v649
    %653 = vrot.lane.b32.xlu0 %v651, 32
    %v654 = vpop.permute.xlu0 %653
    %v656 = vadd.f32 %v646, %v654
    %v657 = vtanh.pop %v656
    %659 = vrot.lane.b32.xlu0 %v657, 64
    %v660 = vpop.permute.xlu0 %659
    %v662 = vmul.f32 %v644, %v660
    %v663 = vstv %s512
    %vm664 = vcmp.lt.s32.totalorder %v663, %v499
    %v665 = vsel %vm664, 1, 0
    %666 = vset.pattern.permute.xlu0 0
    %667 = vperm.xlu0 %666, %v665
    %v668 = vpop.permute.xlu0 %667
    %vm669 = vcmp.eq.s32.totalorder %v668, 1
    %v670 = vsel %vm669, %v662, %v509
    %v671 = vsel %vm669, %v656, %v510
    %v672 = vsel %vm669, %v662, 0.0
    %674 = vrot.lane.b32.xlu0 %v672, 64
    %v675 = vpop.permute.xlu0 %674
    %s677 = scalar_lea.vmem %s7, %s597
    %vm678 = vcmask 518400
    %679 = vst.msk [vmem:[%s677] sm:$0x7] %vm678, %v675
  $region34: #{lstm_wrapper_forward.1} parent=0 // loop_footer
    %s504 = sadd.s32 %s502, 1
  $region35: #{lstm_wrapper_forward.1} parent=0 // loop_footer_branch
    %501 = sbr.rel target = $region31
  $region36: #{lstm_wrapper_forward.1} parent=0 // loop_exit
    _
  // Predicated region
  $region37: #{lstm_wrapper_forward.1} parent=0 // pred_check
    _
  $region38: #{lstm_wrapper_forward.1} parent=0 // pred_check_branch
    %681 = sbr.rel (0) target = $region40
  $region39: #{lstm_wrapper_forward.1} parent=0 // pred_region
    _
  $region40: #{lstm_wrapper_forward.1} parent=0 // pred_fallthru
    _
  // Predicated region
  $region41: #{lstm_wrapper_forward.1} parent=0 // pred_check
    _
  $region42: #{lstm_wrapper_forward.1} parent=0 // pred_check_branch
    %683 = sbr.rel (0) target = $region44
  $region43: #{lstm_wrapper_forward.1} parent=0 // pred_region
    _
  $region44: #{lstm_wrapper_forward.1} parent=0 // pred_fallthru
    _

</llo_original>
